<compile_context>
chip_gen: v7x
topology: tpu7x:2x2x1
jax: 0.10.0
libtpu: 0.0.40
codegen_flags: <defaults>
</compile_context>

<pallas_src>
from functools import partial

import numpy as np
import jax
import jax.numpy as jnp
from jax import lax
from jax.experimental import pallas as pl
from jax.experimental.pallas import tpu as pltpu

# ---- model config (small, consistent with the module) ----
BATCH = 2
SEQ = 8
HIDDEN = 64
NUM_HEADS = 4
NUM_KV_HEADS = 2
HEAD_DIM = HIDDEN // NUM_HEADS            # 16
KV_GROUPS = NUM_HEADS // NUM_KV_HEADS     # 2
HALF = HEAD_DIM // 2                      # 8
DQ = NUM_HEADS * HEAD_DIM                 # 64
DKV = NUM_KV_HEADS * HEAD_DIM             # 32
DQK = DQ + DKV                            # 96
QKV_W = DQK + DKV + DQK                   # 224  = [Q|K main(96), V(32), Q|K swapped(96)]
NEG_INF = -1e9


# ---------------- one-time weight preparation (outside the hot path) ----------------
def prepare_params(q_w, k_w, v_w, o_w):
    """Pre-permute / pre-transpose / pre-concatenate the FusedDense weights.

    * q_w / k_w rows are permuted to a per-head-contiguous [even(8) | odd(8)] layout,
      so each head's rotated Q/K is one contiguous 16-wide slice (QK^T is invariant
      to a per-head column permutation applied to both Q and K).
    * A second, "partner-swapped" copy of the Q/K weights (within-head halves swapped)
      is appended, so the RoPE pairing data movement is done by the MXU during the
      projection instead of by rolls/selects in the kernel.
    * 1/sqrt(head_dim) is folded into the Q weights.
    * Everything is concatenated + transposed into one (HIDDEN, 224) matrix.
    """
    scale = 1.0 / float(np.sqrt(HEAD_DIM))

    def head_perm(n_heads, swap_halves):
        idx = []
        for h in range(n_heads):
            ev = [h * HEAD_DIM + 2 * f for f in range(HALF)]
            od = [h * HEAD_DIM + 2 * f + 1 for f in range(HALF)]
            idx += (od + ev) if swap_halves else (ev + od)
        return np.asarray(idx, dtype=np.int32)

    q_main = q_w[head_perm(NUM_HEADS, False)] * scale
    q_swap = q_w[head_perm(NUM_HEADS, True)] * scale
    k_main = k_w[head_perm(NUM_KV_HEADS, False)]
    k_swap = k_w[head_perm(NUM_KV_HEADS, True)]

    # rows (= projection output columns): [Q main | K main | V | Q swapped | K swapped]
    wqkv_t = jnp.concatenate([q_main, k_main, v_w, q_swap, k_swap], axis=0).T  # (HIDDEN, 224)
    wo_t = o_w.T                                                               # (DQ, HIDDEN)
    return {"wqkv_t": wqkv_t, "wo_t": wo_t}


# ---------------- precomputed tables (wrapper-side, tiny XLA work) ----------------
def _build_trig_tables(cos, sin, batch):
    """(2*B*S, DQK) table: rows 0..BS-1 = cos table, rows BS.. = signed-sin table.

    Per head block of 16 columns (same for every Q and K head):
      cos table  = [cos f0..f7 | cos f0..f7]
      sin table  = [-sin f0..f7 | +sin f0..f7]
    so  rotated = main * cos_tbl + swapped * sin_tbl  reproduces
      even: e*c - o*s,   odd: o*c + e*s.
    """
    c_head = jnp.concatenate([cos, cos], axis=1)                  # (S, HEAD_DIM)
    s_head = jnp.concatenate([-sin, sin], axis=1)                 # (S, HEAD_DIM)
    tc = jnp.tile(c_head, (batch, NUM_HEADS + NUM_KV_HEADS))      # (B*S, DQK)
    ts = jnp.tile(s_head, (batch, NUM_HEADS + NUM_KV_HEADS))      # (B*S, DQK)
    return jnp.concatenate([tc, ts], axis=0)                      # (2*B*S, DQK)


def _build_block_mask(mask, batch):
    """Block-diagonal additive mask (B*S, B*S), tiled x KV_GROUPS along rows for the
    sublane-stacked query heads of each KV group."""
    s = mask.shape[-1]
    eye = jnp.eye(batch, dtype=jnp.float32)
    block = (jnp.kron(eye, mask.astype(jnp.float32))
             + jnp.kron(1.0 - eye, jnp.full((s, s), NEG_INF, jnp.float32)))    # (B*S, B*S)
    return jnp.tile(block, (KV_GROUPS, 1))                                     # (G*B*S, B*S)


# ---------------- fused QKV + RoPE + SDPA + o-proj kernel (single step) ----------------
def _fused_attn_kernel(x_ref, wqkv_ref, wo_ref, trig_ref, mask_ref, o_ref,
                       *, n_heads, n_kv_heads, head_dim, rows):
    groups = n_heads // n_kv_heads
    dq = n_heads * head_dim
    dkv = n_kv_heads * head_dim
    dqk = dq + dkv

    x = x_ref[...]                                                         # (rows, HIDDEN) f32
    # one fused, lane-dense QKV projection (also materializes the RoPE partner-swap)
    qkv = jnp.dot(x, wqkv_ref[...], preferred_element_type=jnp.float32)    # (rows, 224)

    main = qkv[:, :dqk]                    # Q|K, per-head [even|odd] columns
    v_all = qkv[:, dqk:dqk + dkv]          # V, original per-head order
    swp = qkv[:, dqk + dkv:]               # partner-swapped Q|K

    tc = trig_ref[0:rows, :]               # (rows, dqk) cos table
    ts = trig_ref[rows:2 * rows, :]        # (rows, dqk) signed-sin table
    rot = main * tc + swp * ts             # rotated Q|K (1/sqrt(d) pre-folded into Q)

    mask2 = mask_ref[...]                  # (groups*rows, rows) additive, block-diag causal

    dn = (((1,), (1,)), ((), ()))          # contract last dims: Q @ K^T, no transpose op
    acc = jnp.zeros((rows, wo_ref.shape[1]), dtype=jnp.float32)

    # static unroll over KV groups; the group's `groups` query heads are stacked
    # along sublanes so each group needs 1 score dot + 1 softmax + 1 PV dot.
    for g in range(n_kv_heads):
        h0 = g * groups
        q_g = jnp.concatenate(
            [rot[:, (h0 + j) * head_dim:(h0 + j + 1) * head_dim] for j in range(groups)],
            axis=0)                                                        # (groups*rows, hd)
        k_g = rot[:, dq + g * head_dim: dq + (g + 1) * head_dim]           # (rows, hd)
        v_g = v_all[:, g * head_dim:(g + 1) * head_dim]                    # (rows, hd)

        s = lax.dot_general(q_g, k_g, dn, preferred_element_type=jnp.float32)  # (g*rows, rows)
        s = s + mask2
        m = jnp.max(s, axis=-1, keepdims=True)
        p = jnp.exp(s - m)
        p = p / jnp.sum(p, axis=-1, keepdims=True)                         # exact f32 softmax
        pv = jnp.dot(p, v_g, preferred_element_type=jnp.float32)           # (groups*rows, hd)

        # un-stack with 8-row-aligned sublane slices and accumulate straight into the
        # output projection (MXU is idle; avoids the 4-way lane concat).
        for j in range(groups):
            h = h0 + j
            acc = acc + jnp.dot(pv[j * rows:(j + 1) * rows, :],
                                wo_ref[h * head_dim:(h + 1) * head_dim, :],
                                preferred_element_type=jnp.float32)

    o_ref[...] = acc.astype(o_ref.dtype)


# ---------------- full forward (matches Attention.forward, training mode) ----------------
def attention_forward(x, mask, cos, sin, prepared):
    B, S, D = x.shape
    rows = B * S
    x2d = x.reshape(rows, D)

    trig = _build_trig_tables(cos, sin, B)       # (2*rows, DQK)
    mask2 = _build_block_mask(mask, B)           # (KV_GROUPS*rows, rows)

    kernel = partial(_fused_attn_kernel,
                     n_heads=NUM_HEADS, n_kv_heads=NUM_KV_HEADS,
                     head_dim=HEAD_DIM, rows=rows)

    out2d = pl.pallas_call(
        kernel,
        out_shape=jax.ShapeDtypeStruct((rows, D), x.dtype),
        grid=(1,),                                               # single step: whole problem
        in_specs=[
            pl.BlockSpec((rows, D), lambda i: (0, 0)),           # stacked activations
            pl.BlockSpec((D, QKV_W), lambda i: (0, 0)),          # fused QKV(+swap) weight
            pl.BlockSpec((DQ, D), lambda i: (0, 0)),             # o-proj weight (pre-T)
            pl.BlockSpec((2 * rows, DQK), lambda i: (0, 0)),     # packed cos/sin tables
            pl.BlockSpec((KV_GROUPS * rows, rows), lambda i: (0, 0)),  # block-diag mask
        ],
        out_specs=pl.BlockSpec((rows, D), lambda i: (0, 0)),
        compiler_params=pltpu.CompilerParams(
            dimension_semantics=("arbitrary",)),
    )(x2d, prepared["wqkv_t"], prepared["wo_t"], trig, mask2)

    return out2d.reshape(B, S, D)


# ---------------- pure-JAX reference for validation ----------------
def reference(x, mask, cos, sin, params):
    B, S, _ = x.shape
    q = (x @ params["q_w"].T).reshape(B, S, NUM_HEADS, HALF, 2)
    k = (x @ params["k_w"].T).reshape(B, S, NUM_KV_HEADS, HALF, 2)
    v = (x @ params["v_w"].T).reshape(B, S, NUM_KV_HEADS, HEAD_DIM)
    c = cos[None, :, None, :]
    s = sin[None, :, None, :]
    qr = q[..., 0] * c - q[..., 1] * s
    qi = q[..., 0] * s + q[..., 1] * c
    q_rot = jnp.stack([qr, qi], axis=-1).reshape(B, S, NUM_HEADS, HEAD_DIM)
    kr = k[..., 0] * c - k[..., 1] * s
    ki = k[..., 0] * s + k[..., 1] * c
    k_rot = jnp.stack([kr, ki], axis=-1).reshape(B, S, NUM_KV_HEADS, HEAD_DIM)

    q_rot = q_rot.transpose(0, 2, 1, 3)
    k_rot = jnp.repeat(k_rot.transpose(0, 2, 1, 3), KV_GROUPS, axis=1)
    v_r = jnp.repeat(v.transpose(0, 2, 1, 3), KV_GROUPS, axis=1)

    scores = jnp.einsum("bhqd,bhkd->bhqk", q_rot, k_rot) / np.sqrt(HEAD_DIM)
    scores = scores + mask
    p = jax.nn.softmax(scores, axis=-1)
    out = jnp.einsum("bhqk,bhkd->bhqd", p, v_r)
    out = out.transpose(0, 2, 1, 3).reshape(B, S, HIDDEN)
    return out @ params["o_w"].T


if __name__ == "__main__":
    key = jax.random.PRNGKey(0)
    kx, kq, kk, kv, ko = jax.random.split(key, 5)

    x = jax.random.normal(kx, (BATCH, SEQ, HIDDEN), jnp.float32)

    w_scale = 1.0 / np.sqrt(HIDDEN)
    params = {
        "q_w": jax.random.normal(kq, (NUM_HEADS * HEAD_DIM, HIDDEN), jnp.float32) * w_scale,
        "k_w": jax.random.normal(kk, (NUM_KV_HEADS * HEAD_DIM, HIDDEN), jnp.float32) * w_scale,
        "v_w": jax.random.normal(kv, (NUM_KV_HEADS * HEAD_DIM, HIDDEN), jnp.float32) * w_scale,
        "o_w": jax.random.normal(ko, (HIDDEN, NUM_HEADS * HEAD_DIM), jnp.float32) * w_scale,
    }

    # causal additive float mask (what would be passed as `mask` to SDPA)
    causal = jnp.tril(jnp.ones((SEQ, SEQ), dtype=bool))
    mask = jnp.where(causal, 0.0, NEG_INF).astype(jnp.float32)

    # freqs_cis as cos/sin (theta=10000), interleaved-pair convention
    inv_freq = 1.0 / (10000.0 ** (jnp.arange(0, HEAD_DIM, 2, dtype=jnp.float32) / HEAD_DIM))
    t = jnp.arange(SEQ, dtype=jnp.float32)
    angles = jnp.outer(t, inv_freq)          # (S, HALF)
    cos, sin = jnp.cos(angles), jnp.sin(angles)

    # one-time weight prep (permute / swap-copy / transpose / concat / scale fold)
    prepared = prepare_params(params["q_w"], params["k_w"], params["v_w"], params["o_w"])

    fwd = jax.jit(attention_forward)
    out = jax.block_until_ready(fwd(x, mask, cos, sin, prepared))

    ref = reference(x, mask, cos, sin, params)
    # kernel is now fully f32 with exact softmax (accuracy improved vs previous bf16
    # version); tolerance kept at the previously-passing level for robustness against
    # MXU f32-pass precision differences between kernel and XLA reference.
    np.testing.assert_allclose(np.asarray(out), np.asarray(ref), rtol=2e-2, atol=2e-2)
    print("KERNEL_OK")
</pallas_src>

<mosaic_0001>
module attributes {stable_mosaic.version = 11 : i64} {
  func.func @_fused_attn_kernel(%arg0: i32, %arg1: memref<16x64xf32, #tpu.memory_space<vmem>>, %arg2: memref<64x224xf32, #tpu.memory_space<vmem>>, %arg3: memref<64x64xf32, #tpu.memory_space<vmem>>, %arg4: memref<32x96xf32, #tpu.memory_space<vmem>>, %arg5: memref<32x16xf32, #tpu.memory_space<vmem>>, %arg6: memref<16x64xf32, #tpu.memory_space<vmem>>) attributes {dimension_semantics = [#tpu.dimension_semantics<arbitrary>], iteration_bounds = array<i64: 1>, scalar_prefetch = 0 : i64, scratch_operands = 0 : i64, tpu.core_type = #tpu.core_type<tc>, window_params = [{pipeline_mode = #tpu.pipeline_mode<synchronous>, transform_indices = @transform_0, window_bounds = array<i64: 16, 64>}, {pipeline_mode = #tpu.pipeline_mode<synchronous>, transform_indices = @transform_1, window_bounds = array<i64: 64, 224>}, {pipeline_mode = #tpu.pipeline_mode<synchronous>, transform_indices = @transform_2, window_bounds = array<i64: 64, 64>}, {pipeline_mode = #tpu.pipeline_mode<synchronous>, transform_indices = @transform_3, window_bounds = array<i64: 32, 96>}, {pipeline_mode = #tpu.pipeline_mode<synchronous>, transform_indices = @transform_4, window_bounds = array<i64: 32, 16>}, {pipeline_mode = #tpu.pipeline_mode<synchronous>, transform_indices = @transform_5, window_bounds = array<i64: 16, 64>}]} {
    %c0 = arith.constant 0 : index
    %c0_0 = arith.constant 0 : index
    %0 = vector.load %arg1[%c0, %c0_0] : memref<16x64xf32, #tpu.memory_space<vmem>>, vector<16x64xf32>
    %c0_1 = arith.constant 0 : index
    %c0_2 = arith.constant 0 : index
    %1 = vector.load %arg2[%c0_1, %c0_2] : memref<64x224xf32, #tpu.memory_space<vmem>>, vector<64x224xf32>
    %cst = arith.constant dense<0.000000e+00> : vector<16x224xf32>
    %2 = tpu.matmul %0, %1, %cst {dimension_numbers = #tpu.dot_dimension_numbers<[1], [0], [0], [1], [0, 0, 1, 1], [], []>} : vector<16x64xf32>, vector<64x224xf32>, vector<16x224xf32> -> vector<16x224xf32>
    %3 = vector.extract_strided_slice %2 {offsets = [0, 0], sizes = [16, 96], strides = [1, 1]} : vector<16x224xf32> to vector<16x96xf32>
    %4 = vector.extract_strided_slice %2 {offsets = [0, 96], sizes = [16, 32], strides = [1, 1]} : vector<16x224xf32> to vector<16x32xf32>
    %5 = vector.extract_strided_slice %2 {offsets = [0, 128], sizes = [16, 96], strides = [1, 1]} : vector<16x224xf32> to vector<16x96xf32>
    %c0_3 = arith.constant 0 : index
    %c0_4 = arith.constant 0 : index
    %6 = vector.load %arg4[%c0_3, %c0_4] : memref<32x96xf32, #tpu.memory_space<vmem>>, vector<16x96xf32>
    %c16 = arith.constant 16 : index
    %c0_5 = arith.constant 0 : index
    %7 = vector.load %arg4[%c16, %c0_5] : memref<32x96xf32, #tpu.memory_space<vmem>>, vector<16x96xf32>
    %8 = arith.mulf %3, %6 : vector<16x96xf32>
    %9 = arith.mulf %5, %7 : vector<16x96xf32>
    %10 = arith.addf %8, %9 : vector<16x96xf32>
    %c0_6 = arith.constant 0 : index
    %c0_7 = arith.constant 0 : index
    %11 = vector.load %arg5[%c0_6, %c0_7] : memref<32x16xf32, #tpu.memory_space<vmem>>, vector<32x16xf32>
    %cst_8 = arith.constant 0.000000e+00 : f32
    %12 = vector.broadcast %cst_8 : f32 to vector<16x64xf32>
    %13 = vector.extract_strided_slice %10 {offsets = [0, 0], sizes = [16, 16], strides = [1, 1]} : vector<16x96xf32> to vector<16x16xf32>
    %14 = vector.extract_strided_slice %10 {offsets = [0, 16], sizes = [16, 16], strides = [1, 1]} : vector<16x96xf32> to vector<16x16xf32>
    %15 = tpu.concatenate %13, %14 in 0 : vector<16x16xf32>, vector<16x16xf32> -> vector<32x16xf32>
    %16 = vector.extract_strided_slice %10 {offsets = [0, 64], sizes = [16, 16], strides = [1, 1]} : vector<16x96xf32> to vector<16x16xf32>
    %17 = vector.extract_strided_slice %4 {offsets = [0, 0], sizes = [16, 16], strides = [1, 1]} : vector<16x32xf32> to vector<16x16xf32>
    %cst_9 = arith.constant dense<0.000000e+00> : vector<32x16xf32>
    %18 = tpu.matmul %15, %16, %cst_9 {dimension_numbers = #tpu.dot_dimension_numbers<[1], [1], [0], [0], [0, 0, 1, 0], [], []>} : vector<32x16xf32>, vector<16x16xf32>, vector<32x16xf32> -> vector<32x16xf32>
    %19 = arith.addf %18, %11 : vector<32x16xf32>
    %cst_10 = arith.constant dense<0xFF800000> : vector<32xf32>
    %20 = vector.multi_reduction <maximumf>, %19, %cst_10 [1] : vector<32x16xf32> to vector<32xf32>
    %21 = vector.shape_cast %20 : vector<32xf32> to vector<32x1xf32>
    %22 = vector.broadcast %21 : vector<32x1xf32> to vector<32x16xf32>
    %23 = arith.subf %19, %22 : vector<32x16xf32>
    %24 = math.exp %23 : vector<32x16xf32>
    %cst_11 = arith.constant dense<0.000000e+00> : vector<32xf32>
    %25 = vector.multi_reduction <add>, %24, %cst_11 [1] : vector<32x16xf32> to vector<32xf32>
    %26 = vector.shape_cast %25 : vector<32xf32> to vector<32x1xf32>
    %27 = vector.broadcast %26 : vector<32x1xf32> to vector<32x16xf32>
    %28 = arith.divf %24, %27 : vector<32x16xf32>
    %cst_12 = arith.constant dense<0.000000e+00> : vector<32x16xf32>
    %29 = tpu.matmul %28, %17, %cst_12 {dimension_numbers = #tpu.dot_dimension_numbers<[1], [0], [0], [1], [0, 0, 1, 1], [], []>} : vector<32x16xf32>, vector<16x16xf32>, vector<32x16xf32> -> vector<32x16xf32>
    %30 = vector.extract_strided_slice %29 {offsets = [0, 0], sizes = [16, 16], strides = [1, 1]} : vector<32x16xf32> to vector<16x16xf32>
    %c0_13 = arith.constant 0 : index
    %c0_14 = arith.constant 0 : index
    %31 = vector.load %arg3[%c0_13, %c0_14] : memref<64x64xf32, #tpu.memory_space<vmem>>, vector<16x64xf32>
    %cst_15 = arith.constant dense<0.000000e+00> : vector<16x64xf32>
    %32 = tpu.matmul %30, %31, %cst_15 {dimension_numbers = #tpu.dot_dimension_numbers<[1], [0], [0], [1], [0, 0, 1, 1], [], []>} : vector<16x16xf32>, vector<16x64xf32>, vector<16x64xf32> -> vector<16x64xf32>
    %33 = arith.addf %12, %32 : vector<16x64xf32>
    %34 = vector.extract_strided_slice %29 {offsets = [16, 0], sizes = [16, 16], strides = [1, 1]} : vector<32x16xf32> to vector<16x16xf32>
    %c16_16 = arith.constant 16 : index
    %c0_17 = arith.constant 0 : index
    %35 = vector.load %arg3[%c16_16, %c0_17] : memref<64x64xf32, #tpu.memory_space<vmem>>, vector<16x64xf32>
    %cst_18 = arith.constant dense<0.000000e+00> : vector<16x64xf32>
    %36 = tpu.matmul %34, %35, %cst_18 {dimension_numbers = #tpu.dot_dimension_numbers<[1], [0], [0], [1], [0, 0, 1, 1], [], []>} : vector<16x16xf32>, vector<16x64xf32>, vector<16x64xf32> -> vector<16x64xf32>
    %37 = arith.addf %33, %36 : vector<16x64xf32>
    %38 = vector.extract_strided_slice %10 {offsets = [0, 32], sizes = [16, 16], strides = [1, 1]} : vector<16x96xf32> to vector<16x16xf32>
    %39 = vector.extract_strided_slice %10 {offsets = [0, 48], sizes = [16, 16], strides = [1, 1]} : vector<16x96xf32> to vector<16x16xf32>
    %40 = tpu.concatenate %38, %39 in 0 : vector<16x16xf32>, vector<16x16xf32> -> vector<32x16xf32>
    %41 = vector.extract_strided_slice %10 {offsets = [0, 80], sizes = [16, 16], strides = [1, 1]} : vector<16x96xf32> to vector<16x16xf32>
    %42 = vector.extract_strided_slice %4 {offsets = [0, 16], sizes = [16, 16], strides = [1, 1]} : vector<16x32xf32> to vector<16x16xf32>
    %cst_19 = arith.constant dense<0.000000e+00> : vector<32x16xf32>
    %43 = tpu.matmul %40, %41, %cst_19 {dimension_numbers = #tpu.dot_dimension_numbers<[1], [1], [0], [0], [0, 0, 1, 0], [], []>} : vector<32x16xf32>, vector<16x16xf32>, vector<32x16xf32> -> vector<32x16xf32>
    %44 = arith.addf %43, %11 : vector<32x16xf32>
    %cst_20 = arith.constant dense<0xFF800000> : vector<32xf32>
    %45 = vector.multi_reduction <maximumf>, %44, %cst_20 [1] : vector<32x16xf32> to vector<32xf32>
    %46 = vector.shape_cast %45 : vector<32xf32> to vector<32x1xf32>
    %47 = vector.broadcast %46 : vector<32x1xf32> to vector<32x16xf32>
    %48 = arith.subf %44, %47 : vector<32x16xf32>
    %49 = math.exp %48 : vector<32x16xf32>
    %cst_21 = arith.constant dense<0.000000e+00> : vector<32xf32>
    %50 = vector.multi_reduction <add>, %49, %cst_21 [1] : vector<32x16xf32> to vector<32xf32>
    %51 = vector.shape_cast %50 : vector<32xf32> to vector<32x1xf32>
    %52 = vector.broadcast %51 : vector<32x1xf32> to vector<32x16xf32>
    %53 = arith.divf %49, %52 : vector<32x16xf32>
    %cst_22 = arith.constant dense<0.000000e+00> : vector<32x16xf32>
    %54 = tpu.matmul %53, %42, %cst_22 {dimension_numbers = #tpu.dot_dimension_numbers<[1], [0], [0], [1], [0, 0, 1, 1], [], []>} : vector<32x16xf32>, vector<16x16xf32>, vector<32x16xf32> -> vector<32x16xf32>
    %55 = vector.extract_strided_slice %54 {offsets = [0, 0], sizes = [16, 16], strides = [1, 1]} : vector<32x16xf32> to vector<16x16xf32>
    %c32 = arith.constant 32 : index
    %c0_23 = arith.constant 0 : index
    %56 = vector.load %arg3[%c32, %c0_23] : memref<64x64xf32, #tpu.memory_space<vmem>>, vector<16x64xf32>
    %cst_24 = arith.constant dense<0.000000e+00> : vector<16x64xf32>
    %57 = tpu.matmul %55, %56, %cst_24 {dimension_numbers = #tpu.dot_dimension_numbers<[1], [0], [0], [1], [0, 0, 1, 1], [], []>} : vector<16x16xf32>, vector<16x64xf32>, vector<16x64xf32> -> vector<16x64xf32>
    %58 = arith.addf %37, %57 : vector<16x64xf32>
    %59 = vector.extract_strided_slice %54 {offsets = [16, 0], sizes = [16, 16], strides = [1, 1]} : vector<32x16xf32> to vector<16x16xf32>
    %c48 = arith.constant 48 : index
    %c0_25 = arith.constant 0 : index
    %60 = vector.load %arg3[%c48, %c0_25] : memref<64x64xf32, #tpu.memory_space<vmem>>, vector<16x64xf32>
    %cst_26 = arith.constant dense<0.000000e+00> : vector<16x64xf32>
    %61 = tpu.matmul %59, %60, %cst_26 {dimension_numbers = #tpu.dot_dimension_numbers<[1], [0], [0], [1], [0, 0, 1, 1], [], []>} : vector<16x16xf32>, vector<16x64xf32>, vector<16x64xf32> -> vector<16x64xf32>
    %62 = arith.addf %58, %61 : vector<16x64xf32>
    %c0_27 = arith.constant 0 : index
    %c0_28 = arith.constant 0 : index
    %63 = vector.load %arg6[%c0_27, %c0_28] : memref<16x64xf32, #tpu.memory_space<vmem>>, vector<16x64xf32>
    tpu.vector_store %arg6[%c0_27, %c0_28], %62 {strides = array<i32>} : memref<16x64xf32, #tpu.memory_space<vmem>>, vector<16x64xf32>,
    return
  }
  func.func @transform_0(%arg0: i32) -> (i32, i32) {
    %c0_i32 = arith.constant 0 : i32
    %c0_i32_0 = arith.constant 0 : i32
    %c0_i32_1 = arith.constant 0 : i32
    return %c0_i32, %c0_i32_0 : i32, i32
  }
  func.func @transform_1(%arg0: i32) -> (i32, i32) {
    %c0_i32 = arith.constant 0 : i32
    %c0_i32_0 = arith.constant 0 : i32
    %c0_i32_1 = arith.constant 0 : i32
    return %c0_i32, %c0_i32_0 : i32, i32
  }
  func.func @transform_2(%arg0: i32) -> (i32, i32) {
    %c0_i32 = arith.constant 0 : i32
    %c0_i32_0 = arith.constant 0 : i32
    %c0_i32_1 = arith.constant 0 : i32
    return %c0_i32, %c0_i32_0 : i32, i32
  }
  func.func @transform_3(%arg0: i32) -> (i32, i32) {
    %c0_i32 = arith.constant 0 : i32
    %c0_i32_0 = arith.constant 0 : i32
    %c0_i32_1 = arith.constant 0 : i32
    return %c0_i32, %c0_i32_0 : i32, i32
  }
  func.func @transform_4(%arg0: i32) -> (i32, i32) {
    %c0_i32 = arith.constant 0 : i32
    %c0_i32_0 = arith.constant 0 : i32
    %c0_i32_1 = arith.constant 0 : i32
    return %c0_i32, %c0_i32_0 : i32, i32
  }
  func.func @transform_5(%arg0: i32) -> (i32, i32) {
    %c0_i32 = arith.constant 0 : i32
    %c0_i32_0 = arith.constant 0 : i32
    %c0_i32_1 = arith.constant 0 : i32
    return %c0_i32, %c0_i32_0 : i32, i32
  }
}

</mosaic_0001>

<llo_original>
// kernel: neg.1
$region0: #{neg.1}
  #allocation0 [shape = 's32[1]{0}', space=sflag, size = 0x4, scoped, tag = 'scoped memory for neg.1']
  %s0 = inlined_call_operand.vmem [shape: f32[8,8], index: 0, kind: input, shape index: {}]
  %s1 = inlined_call_operand.vmem [shape: f32[8,8], index: 1, kind: output, shape index: {}]
  %v2 = vld [vmem:[%s0] sm:$0xff]
  %3 = xla_tuple %v2
  %4 = xla_tuple %3
  %v5 = vxor.u32 %v2, 2147483648
  %6 = xla_tuple %v5
  %7 = vst [vmem:[%s1] sm:$0xff] %v5

// kernel: tile.23
$region0: #{tile.23}
  #allocation0 [shape = 's32[1]{0}', space=sflag, size = 0x4, scoped, tag = 'scoped memory for tile.23']
  %s0 = inlined_call_operand.vmem [shape: f32[8,16], index: 0, kind: input, shape index: {}]
  %s1 = inlined_call_operand.vmem [shape: f32[2,8,6,16], index: 1, kind: output, shape index: {}]
  // Predicated region
  $region2: #{tile.23} parent=0 // pred_check
    _
  $region3: #{tile.23} parent=0 // pred_check_branch
    %3 = sbr.rel (0) target = $region5
  $region4: #{tile.23} parent=0 // pred_region
    _
  $region5: #{tile.23} parent=0 // pred_fallthru
    _
  %v4 = vld [vmem:[%s0] ss:$0 sm:$0xff]
  %5 = vst [vmem:[%s1] sm:$0xff] %v4
  %s6 = scalar_lea.vmem %s1, 64
  %7 = vst [vmem:[%s6] sm:$0xff] %v4
  %s8 = scalar_lea.vmem %s0, 1
  %v9 = vld [vmem:[%s8] ss:$0 sm:$0xff]
  %s10 = scalar_lea.vmem %s1, 8
  %11 = vst [vmem:[%s10] sm:$0xff] %v9
  %s12 = scalar_lea.vmem %s1, 72
  %13 = vst [vmem:[%s12] sm:$0xff] %v9
  %s14 = scalar_lea.vmem %s0, 2
  %v15 = vld [vmem:[%s14] ss:$0 sm:$0xff]
  %s16 = scalar_lea.vmem %s1, 16
  %17 = vst [vmem:[%s16] sm:$0xff] %v15
  %s18 = scalar_lea.vmem %s1, 80
  %19 = vst [vmem:[%s18] sm:$0xff] %v15
  %s20 = scalar_lea.vmem %s0, 3
  %v21 = vld [vmem:[%s20] ss:$0 sm:$0xff]
  %s22 = scalar_lea.vmem %s1, 24
  %23 = vst [vmem:[%s22] sm:$0xff] %v21
  %s24 = scalar_lea.vmem %s1, 88
  %25 = vst [vmem:[%s24] sm:$0xff] %v21
  %s26 = scalar_lea.vmem %s0, 4
  %v27 = vld [vmem:[%s26] ss:$0 sm:$0xff]
  %s28 = scalar_lea.vmem %s1, 32
  %29 = vst [vmem:[%s28] sm:$0xff] %v27
  %s30 = scalar_lea.vmem %s1, 96
  %31 = vst [vmem:[%s30] sm:$0xff] %v27
  %s32 = scalar_lea.vmem %s0, 5
  %v33 = vld [vmem:[%s32] ss:$0 sm:$0xff]
  %s34 = scalar_lea.vmem %s1, 40
  %35 = vst [vmem:[%s34] sm:$0xff] %v33
  %s36 = scalar_lea.vmem %s1, 104
  %37 = vst [vmem:[%s36] sm:$0xff] %v33
  %s38 = scalar_lea.vmem %s0, 6
  %v39 = vld [vmem:[%s38] ss:$0 sm:$0xff]
  %s40 = scalar_lea.vmem %s1, 48
  %41 = vst [vmem:[%s40] sm:$0xff] %v39
  %s42 = scalar_lea.vmem %s1, 112
  %43 = vst [vmem:[%s42] sm:$0xff] %v39
  %s44 = scalar_lea.vmem %s0, 7
  %v45 = vld [vmem:[%s44] ss:$0 sm:$0xff]
  %s46 = scalar_lea.vmem %s1, 56
  %47 = vst [vmem:[%s46] sm:$0xff] %v45
  %s48 = scalar_lea.vmem %s1, 120
  %49 = vst [vmem:[%s48] sm:$0xff] %v45

// kernel: tile.24
$region0: #{tile.24}
  %s0 = inlined_call_operand.vmem [shape: f32[2,8,6,16], index: 0, kind: input, shape index: {}]
  %s1 = inlined_call_operand.vmem [shape: f32[16,96], index: 1, kind: output, shape index: {}]
  %v2 = vld [vmem:[%s0] ss:$8 sm:$0xf]
  %v3 = vld [vmem:[%s0] ss:$8 sm:$0xf0]
  %vm4 = vcmask 1047556
  %v5 = vsel %vm4, %v3, %v2
  %vm6 = vcmask 130048
  %7 = vst.msk [vmem:[%s1] sm:$0xff] %vm6, %v5
  %s8 = scalar_lea.vmem %s0, 64
  %v9 = vld [vmem:[%s8] ss:$8 sm:$0xf]
  %s10 = scalar_lea.vmem %s0, 64
  %v11 = vld [vmem:[%s10] ss:$8 sm:$0xf0]
  %vm12 = vcmask 1047556
  %v13 = vsel %vm12, %v11, %v9
  %vm14 = vcmask 130048
  %s15 = scalar_lea.vmem %s1, 8
  %16 = vst.msk [vmem:[%s15] sm:$0xff] %vm14, %v13
  %s17 = scalar_lea.vmem %s0, 5
  %v18 = vld [vmem:[%s17] ss:$8 sm:$0xf]
  %s19 = scalar_lea.vmem %s0, 5
  %v20 = vld [vmem:[%s19] ss:$8 sm:$0xf0]
  %vm21 = vcmask 1047556
  %v22 = vsel %vm21, %v20, %v18
  %23 = vrot.lane.b32.xlu0 %v22, 80
  %v24 = vpop.permute.xlu0 %23
  %vm25 = vcmask 786048
  %26 = vst.msk [vmem:[%s1] sm:$0xff] %vm25, %v24
  %s27 = scalar_lea.vmem %s0, 69
  %v28 = vld [vmem:[%s27] ss:$8 sm:$0xf]
  %s29 = scalar_lea.vmem %s0, 69
  %v30 = vld [vmem:[%s29] ss:$8 sm:$0xf0]
  %vm31 = vcmask 1047556
  %v32 = vsel %vm31, %v30, %v28
  %33 = vrot.lane.b32.xlu0 %v32, 80
  %v34 = vpop.permute.xlu0 %33
  %vm35 = vcmask 786048
  %s36 = scalar_lea.vmem %s1, 8
  %37 = vst.msk [vmem:[%s36] sm:$0xff] %vm35, %v34
  %s38 = scalar_lea.vmem %s0, 4
  %v39 = vld [vmem:[%s38] ss:$8 sm:$0xf]
  %s40 = scalar_lea.vmem %s0, 4
  %v41 = vld [vmem:[%s40] ss:$8 sm:$0xf0]
  %vm42 = vcmask 1047556
  %v43 = vsel %vm42, %v41, %v39
  %44 = vrot.lane.b32.xlu0 %v43, 64
  %v45 = vpop.permute.xlu0 %44
  %vm46 = vcmask 654848
  %47 = vst.msk [vmem:[%s1] sm:$0xff] %vm46, %v45
  %s48 = scalar_lea.vmem %s0, 68
  %v49 = vld [vmem:[%s48] ss:$8 sm:$0xf]
  %s50 = scalar_lea.vmem %s0, 68
  %v51 = vld [vmem:[%s50] ss:$8 sm:$0xf0]
  %vm52 = vcmask 1047556
  %v53 = vsel %vm52, %v51, %v49
  %54 = vrot.lane.b32.xlu0 %v53, 64
  %v55 = vpop.permute.xlu0 %54
  %vm56 = vcmask 654848
  %s57 = scalar_lea.vmem %s1, 8
  %58 = vst.msk [vmem:[%s57] sm:$0xff] %vm56, %v55
  %s59 = scalar_lea.vmem %s0, 3
  %v60 = vld [vmem:[%s59] ss:$8 sm:$0xf]
  %s61 = scalar_lea.vmem %s0, 3
  %v62 = vld [vmem:[%s61] ss:$8 sm:$0xf0]
  %vm63 = vcmask 1047556
  %v64 = vsel %vm63, %v62, %v60
  %65 = vrot.lane.b32.xlu0 %v64, 48
  %v66 = vpop.permute.xlu0 %65
  %vm67 = vcmask 523648
  %68 = vst.msk [vmem:[%s1] sm:$0xff] %vm67, %v66
  %s69 = scalar_lea.vmem %s0, 67
  %v70 = vld [vmem:[%s69] ss:$8 sm:$0xf]
  %s71 = scalar_lea.vmem %s0, 67
  %v72 = vld [vmem:[%s71] ss:$8 sm:$0xf0]
  %vm73 = vcmask 1047556
  %v74 = vsel %vm73, %v72, %v70
  %75 = vrot.lane.b32.xlu0 %v74, 48
  %v76 = vpop.permute.xlu0 %75
  %vm77 = vcmask 523648
  %s78 = scalar_lea.vmem %s1, 8
  %79 = vst.msk [vmem:[%s78] sm:$0xff] %vm77, %v76
  %s80 = scalar_lea.vmem %s0, 2
  %v81 = vld [vmem:[%s80] ss:$8 sm:$0xf]
  %s82 = scalar_lea.vmem %s0, 2
  %v83 = vld [vmem:[%s82] ss:$8 sm:$0xf0]
  %vm84 = vcmask 1047556
  %v85 = vsel %vm84, %v83, %v81
  %86 = vrot.lane.b32.xlu0 %v85, 32
  %v87 = vpop.permute.xlu0 %86
  %vm88 = vcmask 392448
  %89 = vst.msk [vmem:[%s1] sm:$0xff] %vm88, %v87
  %s90 = scalar_lea.vmem %s0, 66
  %v91 = vld [vmem:[%s90] ss:$8 sm:$0xf]
  %s92 = scalar_lea.vmem %s0, 66
  %v93 = vld [vmem:[%s92] ss:$8 sm:$0xf0]
  %vm94 = vcmask 1047556
  %v95 = vsel %vm94, %v93, %v91
  %96 = vrot.lane.b32.xlu0 %v95, 32
  %v97 = vpop.permute.xlu0 %96
  %vm98 = vcmask 392448
  %s99 = scalar_lea.vmem %s1, 8
  %100 = vst.msk [vmem:[%s99] sm:$0xff] %vm98, %v97
  %s101 = scalar_lea.vmem %s0, 1
  %v102 = vld [vmem:[%s101] ss:$8 sm:$0xf]
  %s103 = scalar_lea.vmem %s0, 1
  %v104 = vld [vmem:[%s103] ss:$8 sm:$0xf0]
  %vm105 = vcmask 1047556
  %v106 = vsel %vm105, %v104, %v102
  %107 = vrot.lane.b32.xlu0 %v106, 16
  %v108 = vpop.permute.xlu0 %107
  %vm109 = vcmask 261248
  %110 = vst.msk [vmem:[%s1] sm:$0xff] %vm109, %v108
  %s111 = scalar_lea.vmem %s0, 65
  %v112 = vld [vmem:[%s111] ss:$8 sm:$0xf]
  %s113 = scalar_lea.vmem %s0, 65
  %v114 = vld [vmem:[%s113] ss:$8 sm:$0xf0]
  %vm115 = vcmask 1047556
  %v116 = vsel %vm115, %v114, %v112
  %117 = vrot.lane.b32.xlu0 %v116, 16
  %v118 = vpop.permute.xlu0 %117
  %vm119 = vcmask 261248
  %s120 = scalar_lea.vmem %s1, 8
  %121 = vst.msk [vmem:[%s120] sm:$0xff] %vm119, %v118

// kernel: attention_forward.1
$region0: #{attention_forward.1}
  #allocation0 [shape = 'u32[]', space=smem, size = 0x4, offset = 0x4, fixed_abs, tag = 'smem constant byte address 0x4 - core index']
  #allocation1 [shape = 'u32[144,128]{1,0:T(1,128)}', space=vmem, size = 0x12000, scoped, tag = 'internal scratch']
  %s0 = inlined_call_operand.vmem [shape: f32[16,64], index: 0, kind: input, shape index: {}]
  %s1 = inlined_call_operand.vmem [shape: f32[64,224], index: 1, kind: input, shape index: {}]
  %s2 = inlined_call_operand.vmem [shape: f32[64,64], index: 2, kind: input, shape index: {}]
  %s3 = inlined_call_operand.vmem [shape: f32[32,96], index: 3, kind: input, shape index: {}]
  %s4 = inlined_call_operand.vmem [shape: f32[32,16], index: 4, kind: input, shape index: {}]
  %s5 = inlined_call_operand.hbm [shape: f32[16,64], index: 5, kind: output, shape index: {}]
  %s6 = sld [smem:[#allocation0]]
  $region30: #{attention_forward.1} parent=0
    _
  %s8 = ssub.s32 1, %s6
  %s9 = scalar_select 0, %s8, %s6
  $region1: #{attention_forward.1} parent=0
    #allocation2 [shape = 'u8[8192]{0}', space=vmem, size = 0x2000, scoped, tag = 'output window, operand 0, single buffered']
    #allocation3 [shape = 's32[1]{0}', space=sflag, size = 0x4, scoped, tag = 'scoped memory for attention_forward.1']
    %10 = vsyncpa [#allocation3], 0
    // Predicated region
    $region2: #{attention_forward.1} parent=1 // pred_check
      _
    $region3: #{attention_forward.1} parent=1 // pred_check_branch
      %12 = sbr.rel (0) target = $region5
    $region4: #{attention_forward.1} parent=1 // pred_region
      _
    $region5: #{attention_forward.1} parent=1 // pred_fallthru
      _
    // Predicated region
    $region6: #{attention_forward.1} parent=1 // pred_check
      _
    $region7: #{attention_forward.1} parent=1 // pred_check_branch
      %14 = sbr.rel (0) target = $region9
    $region8: #{attention_forward.1} parent=1 // pred_region
      _
    $region9: #{attention_forward.1} parent=1 // pred_fallthru
      _
    // Predicated region
    $region10: #{attention_forward.1} parent=1 // pred_check
      _
    $region11: #{attention_forward.1} parent=1 // pred_check_branch
      %16 = sbr.rel (0) target = $region13
    $region12: #{attention_forward.1} parent=1 // pred_region
      _
    $region13: #{attention_forward.1} parent=1 // pred_fallthru
      _
    // Predicated region
    $region14: #{attention_forward.1} parent=1 // pred_check
      _
    $region15: #{attention_forward.1} parent=1 // pred_check_branch
      %18 = sbr.rel (0) target = $region17
    $region16: #{attention_forward.1} parent=1 // pred_region
      _
    $region17: #{attention_forward.1} parent=1 // pred_fallthru
      _
    // Predicated region
    $region18: #{attention_forward.1} parent=1 // pred_check
      _
    $region19: #{attention_forward.1} parent=1 // pred_check_branch
      %20 = sbr.rel (0) target = $region21
    $region20: #{attention_forward.1} parent=1 // pred_region
      _
    $region21: #{attention_forward.1} parent=1 // pred_fallthru
      _
    %v21 = vld [vmem:[%s0] sm:$0xff]
    %v22 = vld [vmem:[%s0 + $0x8] sm:$0xff]
    %v23 = vld [vmem:[%s1] sm:$0xff]
    %v24 = vld [vmem:[%s1 + $0x8] sm:$0xff]
    %v25 = vld [vmem:[%s1 + $0x10] sm:$0xff]
    %v26 = vld [vmem:[%s1 + $0x18] sm:$0xff]
    %v27 = vld [vmem:[%s1 + $0x20] sm:$0xff]
    %v28 = vld [vmem:[%s1 + $0x28] sm:$0xff]
    %v29 = vld [vmem:[%s1 + $0x30] sm:$0xff]
    %v30 = vld [vmem:[%s1 + $0x38] sm:$0xff]
    %v31 = vld [vmem:[%s1 + $0x40] sm:$0xff]
    %v32 = vld [vmem:[%s1 + $0x48] sm:$0xff]
    %v33 = vld [vmem:[%s1 + $0x50] sm:$0xff]
    %v34 = vld [vmem:[%s1 + $0x58] sm:$0xff]
    %v35 = vld [vmem:[%s1 + $0x60] sm:$0xff]
    %v36 = vld [vmem:[%s1 + $0x68] sm:$0xff]
    %v37 = vld [vmem:[%s1 + $0x70] sm:$0xff]
    %v38 = vld [vmem:[%s1 + $0x78] sm:$0xff]
    %vm39 = vcmask 523264
    %v41 = vsel %vm39, %v21, 0
    %v44 = vsel %vm39, %v22, 0
    %46 = vmatprep.subr.mxu0 %v24
    %47 = vmatpush1.msra.mxu0 %v23
    %48 = vmatprep.subr.mxu0 %v26
    %49 = vmatpush1.msra.mxu0 %v25
    %50 = vmatprep.subr.mxu0 %v28
    %51 = vmatpush1.msra.mxu0 %v27
    %52 = vmatprep.subr.mxu0 %v30
    %53 = vmatpush1.msra.mxu0 %v29
    %54 = vmatprep.subr.mxu0 %v32
    %55 = vmatpush1.msra.mxu0 %v31
    %56 = vmatprep.subr.mxu0 %v34
    %57 = vmatpush1.msra.mxu0 %v33
    %58 = vmatprep.subr.mxu0 %v36
    %59 = vmatpush1.msra.mxu0 %v35
    %60 = vmatprep.subr.mxu0 %v38
    %61 = vmatpush1.msra.mxu0 %v37
    %62 = vmatprep.subr.mxu0 0.0
    %63 = vmatpush1.msra.mxu0 0.0
    %64 = vmatprep.subr.mxu0 0.0
    %65 = vmatpush1.msra.mxu0 0.0
    %66 = vmatprep.subr.mxu0 0.0
    %67 = vmatpush1.msra.mxu0 0.0
    %68 = vmatprep.subr.mxu0 0.0
    %69 = vmatpush1.msra.mxu0 0.0
    %70 = vmatprep.subr.mxu0 0.0
    %71 = vmatpush1.msra.mxu0 0.0
    %72 = vmatprep.subr.mxu0 0.0
    %73 = vmatpush1.msra.mxu0 0.0
    %74 = vmatprep.subr.mxu0 0.0
    %75 = vmatpush1.msra.mxu0 0.0
    %76 = vmatprep.subr.mxu0 0.0
    %77 = vmatpush1.msra.mxu0 0.0
    %78 = vmatprep.subr.mxu0 0.0
    %79 = vmatpush1.msra.mxu0 0.0
    %80 = vmatprep.subr.mxu0 0.0
    %81 = vmatpush1.msra.mxu0 0.0
    %82 = vmatprep.subr.mxu0 0.0
    %83 = vmatpush1.msra.mxu0 0.0
    %84 = vmatprep.subr.mxu0 0.0
    %85 = vmatpush1.msra.mxu0 0.0
    %86 = vmatprep.subr.mxu0 0.0
    %87 = vmatpush1.msra.mxu0 0.0
    %88 = vmatprep.subr.mxu0 0.0
    %89 = vmatpush1.msra.mxu0 0.0
    %90 = vmatprep.subr.mxu0 0.0
    %91 = vmatpush1.msra.mxu0 0.0
    %92 = vmatprep.subr.mxu0 0.0
    %93 = vmatpush1.msra.mxu0 0.0
    %94 = vmatprep.subr.mxu0 0.0
    %95 = vmatpush1.msra.mxu0 0.0
    %96 = vmatprep.subr.mxu0 0.0
    %97 = vmatpush1.msra.mxu0 0.0
    %98 = vmatprep.subr.mxu0 0.0
    %99 = vmatpush1.msra.mxu0 0.0
    %100 = vmatprep.subr.mxu0 0.0
    %101 = vmatpush1.msra.mxu0 0.0
    %102 = vmatprep.subr.mxu0 0.0
    %103 = vmatpush1.msra.mxu0 0.0
    %104 = vmatprep.subr.mxu0 0.0
    %105 = vmatpush1.msra.mxu0 0.0
    %106 = vmatprep.subr.mxu0 0.0
    %107 = vmatpush1.msra.mxu0 0.0
    %108 = vmatprep.subr.mxu0 0.0
    %109 = vmatpush1.msra.mxu0 0.0
    %110 = vmatprep.mubr.f32.mxu0 0.0
    %111 = vmatmul.mubr.f32.gmra.mrb[0].mxu0 %v41
    %v112 = vpop.f32.mrb[0].mxu0
    %v113 = vadd.f32 0.0, %v112
    %v114 = vpop.f32.mrb[0].mxu0
    %v115 = vadd.f32 0.0, %v114
    %116 = vmatprep.mubr.f32.mxu0 0.0
    %117 = vmatmul.mubr.f32.gmra.mrb[0].mxu0 %v44
    %v118 = vpop.f32.mrb[0].mxu0
    %v119 = vadd.f32 0.0, %v118
    %v120 = vpop.f32.mrb[0].mxu0
    %v121 = vadd.f32 0.0, %v120
    %122 = vdwg.mxu0
    %v123 = vld [vmem:[%s3] sm:$0xff]
    %v124 = vld [vmem:[%s3 + $0x8] sm:$0xff]
    %v125 = vld [vmem:[%s3 + $0x10] sm:$0xff]
    %v126 = vld [vmem:[%s3 + $0x18] sm:$0xff]
    %v127 = vmul.f32 %v113, %v123
    %v128 = vmul.f32 %v119, %v124
    %v129 = vmul.f32 %v115, %v125
    %v130 = vmul.f32 %v121, %v126
    %v131 = vadd.f32 %v127, %v129
    %v132 = vadd.f32 %v128, %v130
    %v133 = vld [vmem:[%s4] sm:$0xff]
    %v134 = vld [vmem:[%s4 + $0x8] sm:$0xff]
    %v135 = vld [vmem:[%s4 + $0x10] sm:$0xff]
    %v136 = vld [vmem:[%s4 + $0x18] sm:$0xff]
    %139 = vrot.lane.b32.xlu0 %v131, 112
    %v140 = vpop.permute.xlu0 %139
    %141 = vrot.lane.b32.xlu0 %v132, 112
    %v142 = vpop.permute.xlu0 %141
    %143 = vrot.lane.b32.xlu0 %v131, 64
    %v144 = vpop.permute.xlu0 %143
    %145 = vrot.lane.b32.xlu0 %v132, 64
    %v146 = vpop.permute.xlu0 %145
    %vm147 = vcmask 130048
    %v148 = vsel %vm147, %v131, 0
    %v150 = vsel %vm147, %v132, 0
    %v152 = vsel %vm147, %v140, 0
    %v154 = vsel %vm147, %v142, 0
    %v156 = vsel %vm147, %v144, 0
    %v158 = vsel %vm147, %v146, 0
    %160 = vmatprep.subr.mxu0 0.0
    %161 = vmatpush1.xpose.msra.mxu0 %v156
    %162 = vmatprep.subr.mxu0 0.0
    %163 = vmatpush1.xpose.msra.mxu0 %v158
    %164 = vmatprep.subr.mxu0 0.0
    %165 = vmatpush1.xpose.msra.mxu0 0.0
    %166 = vmatprep.subr.mxu0 0.0
    %167 = vmatpush1.xpose.msra.mxu0 0.0
    %168 = vmatprep.subr.mxu0 0.0
    %169 = vmatpush1.xpose.msra.mxu0 0.0
    %170 = vmatprep.subr.mxu0 0.0
    %171 = vmatpush1.xpose.msra.mxu0 0.0
    %172 = vmatprep.subr.mxu0 0.0
    %173 = vmatpush1.xpose.msra.mxu0 0.0
    %174 = vmatprep.subr.mxu0 0.0
    %175 = vmatpush1.xpose.msra.mxu0 0.0
    %176 = vmatprep.subr.mxu0 0.0
    %177 = vmatpush1.xpose.msra.mxu0 0.0
    %178 = vmatprep.subr.mxu0 0.0
    %179 = vmatpush1.xpose.msra.mxu0 0.0
    %180 = vmatprep.subr.mxu0 0.0
    %181 = vmatpush1.xpose.msra.mxu0 0.0
    %182 = vmatprep.subr.mxu0 0.0
    %183 = vmatpush1.xpose.msra.mxu0 0.0
    %184 = vmatprep.subr.mxu0 0.0
    %185 = vmatpush1.xpose.msra.mxu0 0.0
    %186 = vmatprep.subr.mxu0 0.0
    %187 = vmatpush1.xpose.msra.mxu0 0.0
    %188 = vmatprep.subr.mxu0 0.0
    %189 = vmatpush1.xpose.msra.mxu0 0.0
    %190 = vmatprep.subr.mxu0 0.0
    %191 = vmatpush1.xpose.msra.mxu0 0.0
    %192 = vmatprep.subr.mxu0 0.0
    %193 = vmatpush1.xpose.msra.mxu0 0.0
    %194 = vmatprep.subr.mxu0 0.0
    %195 = vmatpush1.xpose.msra.mxu0 0.0
    %196 = vmatprep.subr.mxu0 0.0
    %197 = vmatpush1.xpose.msra.mxu0 0.0
    %198 = vmatprep.subr.mxu0 0.0
    %199 = vmatpush1.xpose.msra.mxu0 0.0
    %200 = vmatprep.subr.mxu0 0.0
    %201 = vmatpush1.xpose.msra.mxu0 0.0
    %202 = vmatprep.subr.mxu0 0.0
    %203 = vmatpush1.xpose.msra.mxu0 0.0
    %204 = vmatprep.subr.mxu0 0.0
    %205 = vmatpush1.xpose.msra.mxu0 0.0
    %206 = vmatprep.subr.mxu0 0.0
    %207 = vmatpush1.xpose.msra.mxu0 0.0
    %208 = vmatprep.subr.mxu0 0.0
    %209 = vmatpush1.xpose.msra.mxu0 0.0
    %210 = vmatprep.subr.mxu0 0.0
    %211 = vmatpush1.xpose.msra.mxu0 0.0
    %212 = vmatprep.subr.mxu0 0.0
    %213 = vmatpush1.xpose.msra.mxu0 0.0
    %214 = vmatprep.subr.mxu0 0.0
    %215 = vmatpush1.xpose.msra.mxu0 0.0
    %216 = vmatprep.subr.mxu0 0.0
    %217 = vmatpush1.xpose.msra.mxu0 0.0
    %218 = vmatprep.subr.mxu0 0.0
    %219 = vmatpush1.xpose.msra.mxu0 0.0
    %220 = vmatprep.subr.mxu0 0.0
    %221 = vmatpush1.xpose.msra.mxu0 0.0
    %222 = vmatprep.subr.mxu0 0.0
    %223 = vmatpush1.xpose.msra.mxu0 0.0
    %224 = vmatprep.mubr.f32.mxu0 0.0
    %225 = vmatmul.mubr.f32.gmra.mrb[0].mxu0 %v148
    %v226 = vpop.f32.mrb[0].mxu0
    %v227 = vadd.f32 %v133, %v226
    %v228 = vpop.f32.mrb[0].mxu0
    %229 = vmatprep.mubr.f32.mxu0 0.0
    %230 = vmatmul.mubr.f32.gmra.mrb[0].mxu0 %v150
    %v231 = vpop.f32.mrb[0].mxu0
    %v232 = vadd.f32 %v134, %v231
    %v233 = vpop.f32.mrb[0].mxu0
    %234 = vmatprep.mubr.f32.mxu0 0.0
    %235 = vmatmul.mubr.f32.gmra.mrb[0].mxu0 %v152
    %v236 = vpop.f32.mrb[0].mxu0
    %v237 = vadd.f32 %v135, %v236
    %v238 = vpop.f32.mrb[0].mxu0
    %239 = vmatprep.mubr.f32.mxu0 0.0
    %240 = vmatmul.mubr.f32.gmra.mrb[0].mxu0 %v154
    %v241 = vpop.f32.mrb[0].mxu0
    %v242 = vadd.f32 %v136, %v241
    %v243 = vpop.f32.mrb[0].mxu0
    %244 = vdwg.mxu0
    %v245 = vsel %vm147, %v227, -inf
    %246 = vmax.xlane.f32.xlu0 %v245
    %v247 = vpop.xlane.xlu0 %246
    %v248 = vsel %vm147, %v232, -inf
    %249 = vmax.xlane.f32.xlu0 %v248
    %v250 = vpop.xlane.xlu0 %249
    %v251 = vsel %vm147, %v237, -inf
    %252 = vmax.xlane.f32.xlu0 %v251
    %v253 = vpop.xlane.xlu0 %252
    %v254 = vsel %vm147, %v242, -inf
    %255 = vmax.xlane.f32.xlu0 %v254
    %v256 = vpop.xlane.xlu0 %255
    %v257 = vsub.f32 %v227, %v247
    %v258 = vsub.f32 %v232, %v250
    %v259 = vsub.f32 %v237, %v253
    %v260 = vsub.f32 %v242, %v256
    %v261 = vmul.f32 %v257, 1.442695
    %v262 = vpow.pop %v261
    %v263 = vmul.f32 %v258, 1.442695
    %v264 = vpow.pop %v263
    %v265 = vmul.f32 %v259, 1.442695
    %v266 = vpow.pop %v265
    %v267 = vmul.f32 %v260, 1.442695
    %v268 = vpow.pop %v267
    %v269 = vsel %vm147, %v262, 0.0
    %270 = vadd.xlane.f32.xlu0 %v269
    %v271 = vpop.xlane.xlu0 %270
    %v272 = vsel %vm147, %v264, 0.0
    %273 = vadd.xlane.f32.xlu0 %v272
    %v274 = vpop.xlane.xlu0 %273
    %v275 = vsel %vm147, %v266, 0.0
    %276 = vadd.xlane.f32.xlu0 %v275
    %v277 = vpop.xlane.xlu0 %276
    %v278 = vsel %vm147, %v268, 0.0
    %279 = vadd.xlane.f32.xlu0 %v278
    %v280 = vpop.xlane.xlu0 %279
    %v281 = vrcp.pop %v271
    %v282 = vmul.f32 %v262, %v281
    %v283 = vrcp.pop %v274
    %v284 = vmul.f32 %v264, %v283
    %v285 = vrcp.pop %v277
    %v286 = vmul.f32 %v266, %v285
    %v287 = vrcp.pop %v280
    %v288 = vmul.f32 %v268, %v287
    %291 = vrot.lane.b32.xlu0 %v113, 32
    %v292 = vpop.permute.xlu0 %291
    %293 = vrot.lane.b32.xlu0 %v119, 32
    %v294 = vpop.permute.xlu0 %293
    %v298 = vsel %vm147, %v282, 0
    %v301 = vsel %vm147, %v284, 0
    %v304 = vsel %vm147, %v286, 0
    %v307 = vsel %vm147, %v288, 0
    %309 = vmatprep.subr.mxu0 0.0
    %310 = vmatpush1.msra.mxu0 %v292
    %311 = vmatprep.subr.mxu0 0.0
    %312 = vmatpush1.msra.mxu0 %v294
    %313 = vmatprep.subr.mxu0 0.0
    %314 = vmatpush1.msra.mxu0 0.0
    %315 = vmatprep.subr.mxu0 0.0
    %316 = vmatpush1.msra.mxu0 0.0
    %317 = vmatprep.subr.mxu0 0.0
    %318 = vmatpush1.msra.mxu0 0.0
    %319 = vmatprep.subr.mxu0 0.0
    %320 = vmatpush1.msra.mxu0 0.0
    %321 = vmatprep.subr.mxu0 0.0
    %322 = vmatpush1.msra.mxu0 0.0
    %323 = vmatprep.subr.mxu0 0.0
    %324 = vmatpush1.msra.mxu0 0.0
    %325 = vmatprep.subr.mxu0 0.0
    %326 = vmatpush1.msra.mxu0 0.0
    %327 = vmatprep.subr.mxu0 0.0
    %328 = vmatpush1.msra.mxu0 0.0
    %329 = vmatprep.subr.mxu0 0.0
    %330 = vmatpush1.msra.mxu0 0.0
    %331 = vmatprep.subr.mxu0 0.0
    %332 = vmatpush1.msra.mxu0 0.0
    %333 = vmatprep.subr.mxu0 0.0
    %334 = vmatpush1.msra.mxu0 0.0
    %335 = vmatprep.subr.mxu0 0.0
    %336 = vmatpush1.msra.mxu0 0.0
    %337 = vmatprep.subr.mxu0 0.0
    %338 = vmatpush1.msra.mxu0 0.0
    %339 = vmatprep.subr.mxu0 0.0
    %340 = vmatpush1.msra.mxu0 0.0
    %341 = vmatprep.subr.mxu0 0.0
    %342 = vmatpush1.msra.mxu0 0.0
    %343 = vmatprep.subr.mxu0 0.0
    %344 = vmatpush1.msra.mxu0 0.0
    %345 = vmatprep.subr.mxu0 0.0
    %346 = vmatpush1.msra.mxu0 0.0
    %347 = vmatprep.subr.mxu0 0.0
    %348 = vmatpush1.msra.mxu0 0.0
    %349 = vmatprep.subr.mxu0 0.0
    %350 = vmatpush1.msra.mxu0 0.0
    %351 = vmatprep.subr.mxu0 0.0
    %352 = vmatpush1.msra.mxu0 0.0
    %353 = vmatprep.subr.mxu0 0.0
    %354 = vmatpush1.msra.mxu0 0.0
    %355 = vmatprep.subr.mxu0 0.0
    %356 = vmatpush1.msra.mxu0 0.0
    %357 = vmatprep.subr.mxu0 0.0
    %358 = vmatpush1.msra.mxu0 0.0
    %359 = vmatprep.subr.mxu0 0.0
    %360 = vmatpush1.msra.mxu0 0.0
    %361 = vmatprep.subr.mxu0 0.0
    %362 = vmatpush1.msra.mxu0 0.0
    %363 = vmatprep.subr.mxu0 0.0
    %364 = vmatpush1.msra.mxu0 0.0
    %365 = vmatprep.subr.mxu0 0.0
    %366 = vmatpush1.msra.mxu0 0.0
    %367 = vmatprep.subr.mxu0 0.0
    %368 = vmatpush1.msra.mxu0 0.0
    %369 = vmatprep.subr.mxu0 0.0
    %370 = vmatpush1.msra.mxu0 0.0
    %371 = vmatprep.subr.mxu0 0.0
    %372 = vmatpush1.msra.mxu0 0.0
    %373 = vmatprep.mubr.f32.mxu0 0.0
    %374 = vmatmul.mubr.f32.gmra.mrb[0].mxu0 %v298
    %v375 = vpop.f32.mrb[0].mxu0
    %v376 = vadd.f32 0.0, %v375
    %v377 = vpop.f32.mrb[0].mxu0
    %378 = vmatprep.mubr.f32.mxu0 0.0
    %379 = vmatmul.mubr.f32.gmra.mrb[0].mxu0 %v301
    %v380 = vpop.f32.mrb[0].mxu0
    %v381 = vadd.f32 0.0, %v380
    %v382 = vpop.f32.mrb[0].mxu0
    %383 = vmatprep.mubr.f32.mxu0 0.0
    %384 = vmatmul.mubr.f32.gmra.mrb[0].mxu0 %v304
    %v385 = vpop.f32.mrb[0].mxu0
    %v386 = vadd.f32 0.0, %v385
    %v387 = vpop.f32.mrb[0].mxu0
    %388 = vmatprep.mubr.f32.mxu0 0.0
    %389 = vmatmul.mubr.f32.gmra.mrb[0].mxu0 %v307
    %v390 = vpop.f32.mrb[0].mxu0
    %v391 = vadd.f32 0.0, %v390
    %v392 = vpop.f32.mrb[0].mxu0
    %393 = vdwg.mxu0
    %v394 = vld [vmem:[%s2] sm:$0xff]
    %v395 = vld [vmem:[%s2 + $0x8] sm:$0xff]
    %v396 = vld [vmem:[%s2 + $0x10] sm:$0xff]
    %v397 = vld [vmem:[%s2 + $0x18] sm:$0xff]
    %v399 = vsel %vm147, %v386, 0
    %v402 = vsel %vm147, %v391, 0
    %404 = vmatprep.subr.mxu0 0.0
    %405 = vmatpush1.msra.mxu0 %v396
    %406 = vmatprep.subr.mxu0 0.0
    %407 = vmatpush1.msra.mxu0 %v397
    %408 = vmatprep.subr.mxu0 0.0
    %409 = vmatpush1.msra.mxu0 0.0
    %410 = vmatprep.subr.mxu0 0.0
    %411 = vmatpush1.msra.mxu0 0.0
    %412 = vmatprep.subr.mxu0 0.0
    %413 = vmatpush1.msra.mxu0 0.0
    %414 = vmatprep.subr.mxu0 0.0
    %415 = vmatpush1.msra.mxu0 0.0
    %416 = vmatprep.subr.mxu0 0.0
    %417 = vmatpush1.msra.mxu0 0.0
    %418 = vmatprep.subr.mxu0 0.0
    %419 = vmatpush1.msra.mxu0 0.0
    %420 = vmatprep.subr.mxu0 0.0
    %421 = vmatpush1.msra.mxu0 0.0
    %422 = vmatprep.subr.mxu0 0.0
    %423 = vmatpush1.msra.mxu0 0.0
    %424 = vmatprep.subr.mxu0 0.0
    %425 = vmatpush1.msra.mxu0 0.0
    %426 = vmatprep.subr.mxu0 0.0
    %427 = vmatpush1.msra.mxu0 0.0
    %428 = vmatprep.subr.mxu0 0.0
    %429 = vmatpush1.msra.mxu0 0.0
    %430 = vmatprep.subr.mxu0 0.0
    %431 = vmatpush1.msra.mxu0 0.0
    %432 = vmatprep.subr.mxu0 0.0
    %433 = vmatpush1.msra.mxu0 0.0
    %434 = vmatprep.subr.mxu0 0.0
    %435 = vmatpush1.msra.mxu0 0.0
    %436 = vmatprep.subr.mxu0 0.0
    %437 = vmatpush1.msra.mxu0 0.0
    %438 = vmatprep.subr.mxu0 0.0
    %439 = vmatpush1.msra.mxu0 0.0
    %440 = vmatprep.subr.mxu0 0.0
    %441 = vmatpush1.msra.mxu0 0.0
    %442 = vmatprep.subr.mxu0 0.0
    %443 = vmatpush1.msra.mxu0 0.0
    %444 = vmatprep.subr.mxu0 0.0
    %445 = vmatpush1.msra.mxu0 0.0
    %446 = vmatprep.subr.mxu0 0.0
    %447 = vmatpush1.msra.mxu0 0.0
    %448 = vmatprep.subr.mxu0 0.0
    %449 = vmatpush1.msra.mxu0 0.0
    %450 = vmatprep.subr.mxu0 0.0
    %451 = vmatpush1.msra.mxu0 0.0
    %452 = vmatprep.subr.mxu0 0.0
    %453 = vmatpush1.msra.mxu0 0.0
    %454 = vmatprep.subr.mxu0 0.0
    %455 = vmatpush1.msra.mxu0 0.0
    %456 = vmatprep.subr.mxu0 0.0
    %457 = vmatpush1.msra.mxu0 0.0
    %458 = vmatprep.subr.mxu0 0.0
    %459 = vmatpush1.msra.mxu0 0.0
    %460 = vmatprep.subr.mxu0 0.0
    %461 = vmatpush1.msra.mxu0 0.0
    %462 = vmatprep.subr.mxu0 0.0
    %463 = vmatpush1.msra.mxu0 0.0
    %464 = vmatprep.subr.mxu0 0.0
    %465 = vmatpush1.msra.mxu0 0.0
    %466 = vmatprep.subr.mxu0 0.0
    %467 = vmatpush1.msra.mxu0 0.0
    %468 = vmatprep.mubr.f32.mxu0 0.0
    %469 = vmatmul.mubr.f32.gmra.mrb[0].mxu0 %v399
    %v470 = vpop.f32.mrb[0].mxu0
    %v471 = vadd.f32 0.0, %v470
    %v472 = vpop.f32.mrb[0].mxu0
    %473 = vmatprep.mubr.f32.mxu0 0.0
    %474 = vmatmul.mubr.f32.gmra.mrb[0].mxu0 %v402
    %v475 = vpop.f32.mrb[0].mxu0
    %v476 = vadd.f32 0.0, %v475
    %v477 = vpop.f32.mrb[0].mxu0
    %478 = vdwg.mxu0
    %v480 = vsel %vm147, %v376, 0
    %v483 = vsel %vm147, %v381, 0
    %485 = vmatprep.subr.mxu0 0.0
    %486 = vmatpush1.msra.mxu0 %v394
    %487 = vmatprep.subr.mxu0 0.0
    %488 = vmatpush1.msra.mxu0 %v395
    %489 = vmatprep.subr.mxu0 0.0
    %490 = vmatpush1.msra.mxu0 0.0
    %491 = vmatprep.subr.mxu0 0.0
    %492 = vmatpush1.msra.mxu0 0.0
    %493 = vmatprep.subr.mxu0 0.0
    %494 = vmatpush1.msra.mxu0 0.0
    %495 = vmatprep.subr.mxu0 0.0
    %496 = vmatpush1.msra.mxu0 0.0
    %497 = vmatprep.subr.mxu0 0.0
    %498 = vmatpush1.msra.mxu0 0.0
    %499 = vmatprep.subr.mxu0 0.0
    %500 = vmatpush1.msra.mxu0 0.0
    %501 = vmatprep.subr.mxu0 0.0
    %502 = vmatpush1.msra.mxu0 0.0
    %503 = vmatprep.subr.mxu0 0.0
    %504 = vmatpush1.msra.mxu0 0.0
    %505 = vmatprep.subr.mxu0 0.0
    %506 = vmatpush1.msra.mxu0 0.0
    %507 = vmatprep.subr.mxu0 0.0
    %508 = vmatpush1.msra.mxu0 0.0
    %509 = vmatprep.subr.mxu0 0.0
    %510 = vmatpush1.msra.mxu0 0.0
    %511 = vmatprep.subr.mxu0 0.0
    %512 = vmatpush1.msra.mxu0 0.0
    %513 = vmatprep.subr.mxu0 0.0
    %514 = vmatpush1.msra.mxu0 0.0
    %515 = vmatprep.subr.mxu0 0.0
    %516 = vmatpush1.msra.mxu0 0.0
    %517 = vmatprep.subr.mxu0 0.0
    %518 = vmatpush1.msra.mxu0 0.0
    %519 = vmatprep.subr.mxu0 0.0
    %520 = vmatpush1.msra.mxu0 0.0
    %521 = vmatprep.subr.mxu0 0.0
    %522 = vmatpush1.msra.mxu0 0.0
    %523 = vmatprep.subr.mxu0 0.0
    %524 = vmatpush1.msra.mxu0 0.0
    %525 = vmatprep.subr.mxu0 0.0
    %526 = vmatpush1.msra.mxu0 0.0
    %527 = vmatprep.subr.mxu0 0.0
    %528 = vmatpush1.msra.mxu0 0.0
    %529 = vmatprep.subr.mxu0 0.0
    %530 = vmatpush1.msra.mxu0 0.0
    %531 = vmatprep.subr.mxu0 0.0
    %532 = vmatpush1.msra.mxu0 0.0
    %533 = vmatprep.subr.mxu0 0.0
    %534 = vmatpush1.msra.mxu0 0.0
    %535 = vmatprep.subr.mxu0 0.0
    %536 = vmatpush1.msra.mxu0 0.0
    %537 = vmatprep.subr.mxu0 0.0
    %538 = vmatpush1.msra.mxu0 0.0
    %539 = vmatprep.subr.mxu0 0.0
    %540 = vmatpush1.msra.mxu0 0.0
    %541 = vmatprep.subr.mxu0 0.0
    %542 = vmatpush1.msra.mxu0 0.0
    %543 = vmatprep.subr.mxu0 0.0
    %544 = vmatpush1.msra.mxu0 0.0
    %545 = vmatprep.subr.mxu0 0.0
    %546 = vmatpush1.msra.mxu0 0.0
    %547 = vmatprep.subr.mxu0 0.0
    %548 = vmatpush1.msra.mxu0 0.0
    %549 = vmatprep.mubr.f32.mxu0 0.0
    %550 = vmatmul.mubr.f32.gmra.mrb[0].mxu0 %v480
    %v551 = vpop.f32.mrb[0].mxu0
    %v552 = vadd.f32 %v471, %v551
    %v553 = vpop.f32.mrb[0].mxu0
    %554 = vmatprep.mubr.f32.mxu0 0.0
    %555 = vmatmul.mubr.f32.gmra.mrb[0].mxu0 %v483
    %v556 = vpop.f32.mrb[0].mxu0
    %v557 = vadd.f32 %v476, %v556
    %v558 = vpop.f32.mrb[0].mxu0
    %559 = vdwg.mxu0
    %560 = vrot.lane.b32.xlu0 %v131, 96
    %v561 = vpop.permute.xlu0 %560
    %562 = vrot.lane.b32.xlu0 %v132, 96
    %v563 = vpop.permute.xlu0 %562
    %564 = vrot.lane.b32.xlu0 %v140, 96
    %v565 = vpop.permute.xlu0 %564
    %566 = vrot.lane.b32.xlu0 %v142, 96
    %v567 = vpop.permute.xlu0 %566
    %568 = vrot.lane.b32.xlu0 %v131, 48
    %v569 = vpop.permute.xlu0 %568
    %570 = vrot.lane.b32.xlu0 %v132, 48
    %v571 = vpop.permute.xlu0 %570
    %v572 = vsel %vm147, %v561, 0
    %v574 = vsel %vm147, %v563, 0
    %v576 = vsel %vm147, %v565, 0
    %v578 = vsel %vm147, %v567, 0
    %v580 = vsel %vm147, %v569, 0
    %v582 = vsel %vm147, %v571, 0
    %584 = vmatprep.subr.mxu0 0.0
    %585 = vmatpush1.xpose.msra.mxu0 %v580
    %586 = vmatprep.subr.mxu0 0.0
    %587 = vmatpush1.xpose.msra.mxu0 %v582
    %588 = vmatprep.subr.mxu0 0.0
    %589 = vmatpush1.xpose.msra.mxu0 0.0
    %590 = vmatprep.subr.mxu0 0.0
    %591 = vmatpush1.xpose.msra.mxu0 0.0
    %592 = vmatprep.subr.mxu0 0.0
    %593 = vmatpush1.xpose.msra.mxu0 0.0
    %594 = vmatprep.subr.mxu0 0.0
    %595 = vmatpush1.xpose.msra.mxu0 0.0
    %596 = vmatprep.subr.mxu0 0.0
    %597 = vmatpush1.xpose.msra.mxu0 0.0
    %598 = vmatprep.subr.mxu0 0.0
    %599 = vmatpush1.xpose.msra.mxu0 0.0
    %600 = vmatprep.subr.mxu0 0.0
    %601 = vmatpush1.xpose.msra.mxu0 0.0
    %602 = vmatprep.subr.mxu0 0.0
    %603 = vmatpush1.xpose.msra.mxu0 0.0
    %604 = vmatprep.subr.mxu0 0.0
    %605 = vmatpush1.xpose.msra.mxu0 0.0
    %606 = vmatprep.subr.mxu0 0.0
    %607 = vmatpush1.xpose.msra.mxu0 0.0
    %608 = vmatprep.subr.mxu0 0.0
    %609 = vmatpush1.xpose.msra.mxu0 0.0
    %610 = vmatprep.subr.mxu0 0.0
    %611 = vmatpush1.xpose.msra.mxu0 0.0
    %612 = vmatprep.subr.mxu0 0.0
    %613 = vmatpush1.xpose.msra.mxu0 0.0
    %614 = vmatprep.subr.mxu0 0.0
    %615 = vmatpush1.xpose.msra.mxu0 0.0
    %616 = vmatprep.subr.mxu0 0.0
    %617 = vmatpush1.xpose.msra.mxu0 0.0
    %618 = vmatprep.subr.mxu0 0.0
    %619 = vmatpush1.xpose.msra.mxu0 0.0
    %620 = vmatprep.subr.mxu0 0.0
    %621 = vmatpush1.xpose.msra.mxu0 0.0
    %622 = vmatprep.subr.mxu0 0.0
    %623 = vmatpush1.xpose.msra.mxu0 0.0
    %624 = vmatprep.subr.mxu0 0.0
    %625 = vmatpush1.xpose.msra.mxu0 0.0
    %626 = vmatprep.subr.mxu0 0.0
    %627 = vmatpush1.xpose.msra.mxu0 0.0
    %628 = vmatprep.subr.mxu0 0.0
    %629 = vmatpush1.xpose.msra.mxu0 0.0
    %630 = vmatprep.subr.mxu0 0.0
    %631 = vmatpush1.xpose.msra.mxu0 0.0
    %632 = vmatprep.subr.mxu0 0.0
    %633 = vmatpush1.xpose.msra.mxu0 0.0
    %634 = vmatprep.subr.mxu0 0.0
    %635 = vmatpush1.xpose.msra.mxu0 0.0
    %636 = vmatprep.subr.mxu0 0.0
    %637 = vmatpush1.xpose.msra.mxu0 0.0
    %638 = vmatprep.subr.mxu0 0.0
    %639 = vmatpush1.xpose.msra.mxu0 0.0
    %640 = vmatprep.subr.mxu0 0.0
    %641 = vmatpush1.xpose.msra.mxu0 0.0
    %642 = vmatprep.subr.mxu0 0.0
    %643 = vmatpush1.xpose.msra.mxu0 0.0
    %644 = vmatprep.subr.mxu0 0.0
    %645 = vmatpush1.xpose.msra.mxu0 0.0
    %646 = vmatprep.subr.mxu0 0.0
    %647 = vmatpush1.xpose.msra.mxu0 0.0
    %648 = vmatprep.mubr.f32.mxu0 0.0
    %649 = vmatmul.mubr.f32.gmra.mrb[0].mxu0 %v572
    %v650 = vpop.f32.mrb[0].mxu0
    %v651 = vadd.f32 %v133, %v650
    %v652 = vpop.f32.mrb[0].mxu0
    %653 = vmatprep.mubr.f32.mxu0 0.0
    %654 = vmatmul.mubr.f32.gmra.mrb[0].mxu0 %v574
    %v655 = vpop.f32.mrb[0].mxu0
    %v656 = vadd.f32 %v134, %v655
    %v657 = vpop.f32.mrb[0].mxu0
    %658 = vmatprep.mubr.f32.mxu0 0.0
    %659 = vmatmul.mubr.f32.gmra.mrb[0].mxu0 %v576
    %v660 = vpop.f32.mrb[0].mxu0
    %v661 = vadd.f32 %v135, %v660
    %v662 = vpop.f32.mrb[0].mxu0
    %663 = vmatprep.mubr.f32.mxu0 0.0
    %664 = vmatmul.mubr.f32.gmra.mrb[0].mxu0 %v578
    %v665 = vpop.f32.mrb[0].mxu0
    %v666 = vadd.f32 %v136, %v665
    %v667 = vpop.f32.mrb[0].mxu0
    %668 = vdwg.mxu0
    %v669 = vsel %vm147, %v651, -inf
    %670 = vmax.xlane.f32.xlu0 %v669
    %v671 = vpop.xlane.xlu0 %670
    %v672 = vsel %vm147, %v656, -inf
    %673 = vmax.xlane.f32.xlu0 %v672
    %v674 = vpop.xlane.xlu0 %673
    %v675 = vsel %vm147, %v661, -inf
    %676 = vmax.xlane.f32.xlu0 %v675
    %v677 = vpop.xlane.xlu0 %676
    %v678 = vsel %vm147, %v666, -inf
    %679 = vmax.xlane.f32.xlu0 %v678
    %v680 = vpop.xlane.xlu0 %679
    %v681 = vsub.f32 %v651, %v671
    %v682 = vsub.f32 %v656, %v674
    %v683 = vsub.f32 %v661, %v677
    %v684 = vsub.f32 %v666, %v680
    %v685 = vmul.f32 %v681, 1.442695
    %v686 = vpow.pop %v685
    %v687 = vmul.f32 %v682, 1.442695
    %v688 = vpow.pop %v687
    %v689 = vmul.f32 %v683, 1.442695
    %v690 = vpow.pop %v689
    %v691 = vmul.f32 %v684, 1.442695
    %v692 = vpow.pop %v691
    %v693 = vsel %vm147, %v686, 0.0
    %694 = vadd.xlane.f32.xlu0 %v693
    %v695 = vpop.xlane.xlu0 %694
    %v696 = vsel %vm147, %v688, 0.0
    %697 = vadd.xlane.f32.xlu0 %v696
    %v698 = vpop.xlane.xlu0 %697
    %v699 = vsel %vm147, %v690, 0.0
    %700 = vadd.xlane.f32.xlu0 %v699
    %v701 = vpop.xlane.xlu0 %700
    %v702 = vsel %vm147, %v692, 0.0
    %703 = vadd.xlane.f32.xlu0 %v702
    %v704 = vpop.xlane.xlu0 %703
    %v705 = vrcp.pop %v695
    %v706 = vmul.f32 %v686, %v705
    %v707 = vrcp.pop %v698
    %v708 = vmul.f32 %v688, %v707
    %v709 = vrcp.pop %v701
    %v710 = vmul.f32 %v690, %v709
    %v711 = vrcp.pop %v704
    %v712 = vmul.f32 %v692, %v711
    %713 = vrot.lane.b32.xlu0 %v113, 16
    %v714 = vpop.permute.xlu0 %713
    %715 = vrot.lane.b32.xlu0 %v119, 16
    %v716 = vpop.permute.xlu0 %715
    %v720 = vsel %vm147, %v706, 0
    %v723 = vsel %vm147, %v708, 0
    %v726 = vsel %vm147, %v710, 0
    %v729 = vsel %vm147, %v712, 0
    %731 = vmatprep.subr.mxu0 0.0
    %732 = vmatpush1.msra.mxu0 %v714
    %733 = vmatprep.subr.mxu0 0.0
    %734 = vmatpush1.msra.mxu0 %v716
    %735 = vmatprep.subr.mxu0 0.0
    %736 = vmatpush1.msra.mxu0 0.0
    %737 = vmatprep.subr.mxu0 0.0
    %738 = vmatpush1.msra.mxu0 0.0
    %739 = vmatprep.subr.mxu0 0.0
    %740 = vmatpush1.msra.mxu0 0.0
    %741 = vmatprep.subr.mxu0 0.0
    %742 = vmatpush1.msra.mxu0 0.0
    %743 = vmatprep.subr.mxu0 0.0
    %744 = vmatpush1.msra.mxu0 0.0
    %745 = vmatprep.subr.mxu0 0.0
    %746 = vmatpush1.msra.mxu0 0.0
    %747 = vmatprep.subr.mxu0 0.0
    %748 = vmatpush1.msra.mxu0 0.0
    %749 = vmatprep.subr.mxu0 0.0
    %750 = vmatpush1.msra.mxu0 0.0
    %751 = vmatprep.subr.mxu0 0.0
    %752 = vmatpush1.msra.mxu0 0.0
    %753 = vmatprep.subr.mxu0 0.0
    %754 = vmatpush1.msra.mxu0 0.0
    %755 = vmatprep.subr.mxu0 0.0
    %756 = vmatpush1.msra.mxu0 0.0
    %757 = vmatprep.subr.mxu0 0.0
    %758 = vmatpush1.msra.mxu0 0.0
    %759 = vmatprep.subr.mxu0 0.0
    %760 = vmatpush1.msra.mxu0 0.0
    %761 = vmatprep.subr.mxu0 0.0
    %762 = vmatpush1.msra.mxu0 0.0
    %763 = vmatprep.subr.mxu0 0.0
    %764 = vmatpush1.msra.mxu0 0.0
    %765 = vmatprep.subr.mxu0 0.0
    %766 = vmatpush1.msra.mxu0 0.0
    %767 = vmatprep.subr.mxu0 0.0
    %768 = vmatpush1.msra.mxu0 0.0
    %769 = vmatprep.subr.mxu0 0.0
    %770 = vmatpush1.msra.mxu0 0.0
    %771 = vmatprep.subr.mxu0 0.0
    %772 = vmatpush1.msra.mxu0 0.0
    %773 = vmatprep.subr.mxu0 0.0
    %774 = vmatpush1.msra.mxu0 0.0
    %775 = vmatprep.subr.mxu0 0.0
    %776 = vmatpush1.msra.mxu0 0.0
    %777 = vmatprep.subr.mxu0 0.0
    %778 = vmatpush1.msra.mxu0 0.0
    %779 = vmatprep.subr.mxu0 0.0
    %780 = vmatpush1.msra.mxu0 0.0
    %781 = vmatprep.subr.mxu0 0.0
    %782 = vmatpush1.msra.mxu0 0.0
    %783 = vmatprep.subr.mxu0 0.0
    %784 = vmatpush1.msra.mxu0 0.0
    %785 = vmatprep.subr.mxu0 0.0
    %786 = vmatpush1.msra.mxu0 0.0
    %787 = vmatprep.subr.mxu0 0.0
    %788 = vmatpush1.msra.mxu0 0.0
    %789 = vmatprep.subr.mxu0 0.0
    %790 = vmatpush1.msra.mxu0 0.0
    %791 = vmatprep.subr.mxu0 0.0
    %792 = vmatpush1.msra.mxu0 0.0
    %793 = vmatprep.subr.mxu0 0.0
    %794 = vmatpush1.msra.mxu0 0.0
    %795 = vmatprep.mubr.f32.mxu0 0.0
    %796 = vmatmul.mubr.f32.gmra.mrb[0].mxu0 %v720
    %v797 = vpop.f32.mrb[0].mxu0
    %v798 = vadd.f32 0.0, %v797
    %v799 = vpop.f32.mrb[0].mxu0
    %800 = vmatprep.mubr.f32.mxu0 0.0
    %801 = vmatmul.mubr.f32.gmra.mrb[0].mxu0 %v723
    %v802 = vpop.f32.mrb[0].mxu0
    %v803 = vadd.f32 0.0, %v802
    %v804 = vpop.f32.mrb[0].mxu0
    %805 = vmatprep.mubr.f32.mxu0 0.0
    %806 = vmatmul.mubr.f32.gmra.mrb[0].mxu0 %v726
    %v807 = vpop.f32.mrb[0].mxu0
    %v808 = vadd.f32 0.0, %v807
    %v809 = vpop.f32.mrb[0].mxu0
    %810 = vmatprep.mubr.f32.mxu0 0.0
    %811 = vmatmul.mubr.f32.gmra.mrb[0].mxu0 %v729
    %v812 = vpop.f32.mrb[0].mxu0
    %v813 = vadd.f32 0.0, %v812
    %v814 = vpop.f32.mrb[0].mxu0
    %815 = vdwg.mxu0
    %v816 = vld [vmem:[%s2 + $0x20] sm:$0xff]
    %v817 = vld [vmem:[%s2 + $0x28] sm:$0xff]
    %v819 = vsel %vm147, %v798, 0
    %v822 = vsel %vm147, %v803, 0
    %824 = vmatprep.subr.mxu0 0.0
    %825 = vmatpush1.msra.mxu0 %v816
    %826 = vmatprep.subr.mxu0 0.0
    %827 = vmatpush1.msra.mxu0 %v817
    %828 = vmatprep.subr.mxu0 0.0
    %829 = vmatpush1.msra.mxu0 0.0
    %830 = vmatprep.subr.mxu0 0.0
    %831 = vmatpush1.msra.mxu0 0.0
    %832 = vmatprep.subr.mxu0 0.0
    %833 = vmatpush1.msra.mxu0 0.0
    %834 = vmatprep.subr.mxu0 0.0
    %835 = vmatpush1.msra.mxu0 0.0
    %836 = vmatprep.subr.mxu0 0.0
    %837 = vmatpush1.msra.mxu0 0.0
    %838 = vmatprep.subr.mxu0 0.0
    %839 = vmatpush1.msra.mxu0 0.0
    %840 = vmatprep.subr.mxu0 0.0
    %841 = vmatpush1.msra.mxu0 0.0
    %842 = vmatprep.subr.mxu0 0.0
    %843 = vmatpush1.msra.mxu0 0.0
    %844 = vmatprep.subr.mxu0 0.0
    %845 = vmatpush1.msra.mxu0 0.0
    %846 = vmatprep.subr.mxu0 0.0
    %847 = vmatpush1.msra.mxu0 0.0
    %848 = vmatprep.subr.mxu0 0.0
    %849 = vmatpush1.msra.mxu0 0.0
    %850 = vmatprep.subr.mxu0 0.0
    %851 = vmatpush1.msra.mxu0 0.0
    %852 = vmatprep.subr.mxu0 0.0
    %853 = vmatpush1.msra.mxu0 0.0
    %854 = vmatprep.subr.mxu0 0.0
    %855 = vmatpush1.msra.mxu0 0.0
    %856 = vmatprep.subr.mxu0 0.0
    %857 = vmatpush1.msra.mxu0 0.0
    %858 = vmatprep.subr.mxu0 0.0
    %859 = vmatpush1.msra.mxu0 0.0
    %860 = vmatprep.subr.mxu0 0.0
    %861 = vmatpush1.msra.mxu0 0.0
    %862 = vmatprep.subr.mxu0 0.0
    %863 = vmatpush1.msra.mxu0 0.0
    %864 = vmatprep.subr.mxu0 0.0
    %865 = vmatpush1.msra.mxu0 0.0
    %866 = vmatprep.subr.mxu0 0.0
    %867 = vmatpush1.msra.mxu0 0.0
    %868 = vmatprep.subr.mxu0 0.0
    %869 = vmatpush1.msra.mxu0 0.0
    %870 = vmatprep.subr.mxu0 0.0
    %871 = vmatpush1.msra.mxu0 0.0
    %872 = vmatprep.subr.mxu0 0.0
    %873 = vmatpush1.msra.mxu0 0.0
    %874 = vmatprep.subr.mxu0 0.0
    %875 = vmatpush1.msra.mxu0 0.0
    %876 = vmatprep.subr.mxu0 0.0
    %877 = vmatpush1.msra.mxu0 0.0
    %878 = vmatprep.subr.mxu0 0.0
    %879 = vmatpush1.msra.mxu0 0.0
    %880 = vmatprep.subr.mxu0 0.0
    %881 = vmatpush1.msra.mxu0 0.0
    %882 = vmatprep.subr.mxu0 0.0
    %883 = vmatpush1.msra.mxu0 0.0
    %884 = vmatprep.subr.mxu0 0.0
    %885 = vmatpush1.msra.mxu0 0.0
    %886 = vmatprep.subr.mxu0 0.0
    %887 = vmatpush1.msra.mxu0 0.0
    %888 = vmatprep.mubr.f32.mxu0 0.0
    %889 = vmatmul.mubr.f32.gmra.mrb[0].mxu0 %v819
    %v890 = vpop.f32.mrb[0].mxu0
    %v891 = vadd.f32 0.0, %v890
    %v892 = vpop.f32.mrb[0].mxu0
    %893 = vmatprep.mubr.f32.mxu0 0.0
    %894 = vmatmul.mubr.f32.gmra.mrb[0].mxu0 %v822
    %v895 = vpop.f32.mrb[0].mxu0
    %v896 = vadd.f32 0.0, %v895
    %v897 = vpop.f32.mrb[0].mxu0
    %898 = vdwg.mxu0
    %v899 = vadd.f32 %v552, %v891
    %v900 = vadd.f32 %v557, %v896
    %v901 = vld [vmem:[%s2 + $0x30] sm:$0xff]
    %v902 = vld [vmem:[%s2 + $0x38] sm:$0xff]
    %v904 = vsel %vm147, %v808, 0
    %v907 = vsel %vm147, %v813, 0
    %909 = vmatprep.subr.mxu0 0.0
    %910 = vmatpush1.msra.mxu0 %v901
    %911 = vmatprep.subr.mxu0 0.0
    %912 = vmatpush1.msra.mxu0 %v902
    %913 = vmatprep.subr.mxu0 0.0
    %914 = vmatpush1.msra.mxu0 0.0
    %915 = vmatprep.subr.mxu0 0.0
    %916 = vmatpush1.msra.mxu0 0.0
    %917 = vmatprep.subr.mxu0 0.0
    %918 = vmatpush1.msra.mxu0 0.0
    %919 = vmatprep.subr.mxu0 0.0
    %920 = vmatpush1.msra.mxu0 0.0
    %921 = vmatprep.subr.mxu0 0.0
    %922 = vmatpush1.msra.mxu0 0.0
    %923 = vmatprep.subr.mxu0 0.0
    %924 = vmatpush1.msra.mxu0 0.0
    %925 = vmatprep.subr.mxu0 0.0
    %926 = vmatpush1.msra.mxu0 0.0
    %927 = vmatprep.subr.mxu0 0.0
    %928 = vmatpush1.msra.mxu0 0.0
    %929 = vmatprep.subr.mxu0 0.0
    %930 = vmatpush1.msra.mxu0 0.0
    %931 = vmatprep.subr.mxu0 0.0
    %932 = vmatpush1.msra.mxu0 0.0
    %933 = vmatprep.subr.mxu0 0.0
    %934 = vmatpush1.msra.mxu0 0.0
    %935 = vmatprep.subr.mxu0 0.0
    %936 = vmatpush1.msra.mxu0 0.0
    %937 = vmatprep.subr.mxu0 0.0
    %938 = vmatpush1.msra.mxu0 0.0
    %939 = vmatprep.subr.mxu0 0.0
    %940 = vmatpush1.msra.mxu0 0.0
    %941 = vmatprep.subr.mxu0 0.0
    %942 = vmatpush1.msra.mxu0 0.0
    %943 = vmatprep.subr.mxu0 0.0
    %944 = vmatpush1.msra.mxu0 0.0
    %945 = vmatprep.subr.mxu0 0.0
    %946 = vmatpush1.msra.mxu0 0.0
    %947 = vmatprep.subr.mxu0 0.0
    %948 = vmatpush1.msra.mxu0 0.0
    %949 = vmatprep.subr.mxu0 0.0
    %950 = vmatpush1.msra.mxu0 0.0
    %951 = vmatprep.subr.mxu0 0.0
    %952 = vmatpush1.msra.mxu0 0.0
    %953 = vmatprep.subr.mxu0 0.0
    %954 = vmatpush1.msra.mxu0 0.0
    %955 = vmatprep.subr.mxu0 0.0
    %956 = vmatpush1.msra.mxu0 0.0
    %957 = vmatprep.subr.mxu0 0.0
    %958 = vmatpush1.msra.mxu0 0.0
    %959 = vmatprep.subr.mxu0 0.0
    %960 = vmatpush1.msra.mxu0 0.0
    %961 = vmatprep.subr.mxu0 0.0
    %962 = vmatpush1.msra.mxu0 0.0
    %963 = vmatprep.subr.mxu0 0.0
    %964 = vmatpush1.msra.mxu0 0.0
    %965 = vmatprep.subr.mxu0 0.0
    %966 = vmatpush1.msra.mxu0 0.0
    %967 = vmatprep.subr.mxu0 0.0
    %968 = vmatpush1.msra.mxu0 0.0
    %969 = vmatprep.subr.mxu0 0.0
    %970 = vmatpush1.msra.mxu0 0.0
    %971 = vmatprep.subr.mxu0 0.0
    %972 = vmatpush1.msra.mxu0 0.0
    %973 = vmatprep.mubr.f32.mxu0 0.0
    %974 = vmatmul.mubr.f32.gmra.mrb[0].mxu0 %v904
    %v975 = vpop.f32.mrb[0].mxu0
    %v976 = vadd.f32 0.0, %v975
    %v977 = vpop.f32.mrb[0].mxu0
    %978 = vmatprep.mubr.f32.mxu0 0.0
    %979 = vmatmul.mubr.f32.gmra.mrb[0].mxu0 %v907
    %v980 = vpop.f32.mrb[0].mxu0
    %v981 = vadd.f32 0.0, %v980
    %v982 = vpop.f32.mrb[0].mxu0
    %983 = vdwg.mxu0
    %v984 = vadd.f32 %v899, %v976
    %v985 = vadd.f32 %v900, %v981
    %986 = vst.msk [vmem:[#allocation2] sm:$0xff] %vm39, %v984
    %987 = vst.msk [vmem:[#allocation2 + $0x8] sm:$0xff] %vm39, %v985
    // Predicated region
    $region22: #{attention_forward.1} parent=1 // pred_check
      _
    $region23: #{attention_forward.1} parent=1 // pred_check_branch
      %989 = sbr.rel (0) target = $region25
    $region24: #{attention_forward.1} parent=1 // pred_region
      %s991 = ssub.s32 256, 256
      %992 = vsyncadd [#allocation3], %s991
      %s993 = sshll.u32 [#allocation2], 4
      %s994 = int_to_ptr.vmem [resolvable:$true] %s993
      %999 = dma.vmem_to_hbm [thread:$0]  %s994, 256, %s5, [#allocation3], 128, 128, 8
    $region25: #{attention_forward.1} parent=1 // pred_fallthru
      _
    // Predicated region
    $region26: #{attention_forward.1} parent=1 // pred_check
      _
    $region27: #{attention_forward.1} parent=1 // pred_check_branch
      %1001 = sbr.rel (0) target = $region29
    $region28: #{attention_forward.1} parent=1 // pred_region
      %1002 = dma.done [#allocation3], 256
    $region29: #{attention_forward.1} parent=1 // pred_fallthru
      _
    %1003 = vsyncpa [#allocation3], 1

</llo_original>
